<compile_context>
chip_gen: v7x
topology: tpu7x:2x2x1
jax: 0.10.0
libtpu: 0.0.40
codegen_flags: <defaults>
</compile_context>

<pallas_src>
import jax
import jax.numpy as jnp
from jax import lax
from jax.experimental import pallas as pl
from jax.experimental.pallas import tpu as pltpu

_NEG_BIG = -1e30  # bias value for padded output classes (exp -> 0 in log_softmax)


def _round_up(n, m):
    return ((n + m - 1) // m) * m


# ---------------------------------------------------------------------------
# Kernel 1: hoisted layer-0 input projection   xw = x @ W_ih0 + b0
# ---------------------------------------------------------------------------
def _in_proj_kernel(x_ref, w_ref, b_ref, o_ref):
    o_ref[...] = (jnp.dot(x_ref[...], w_ref[...],
                          preferred_element_type=jnp.float32)
                  + b_ref[...]).astype(o_ref.dtype)


def input_gate_proj(x2d, w, b):
    """x2d: (N, I) bf16; w: (I, 4H) bf16; b: (1, 4H) f32 -> (N, 4H) f32."""
    N, I = x2d.shape
    G = w.shape[-1]
    rt = min(256, _round_up(N, 8))        # row tile (sublane-aligned)
    Np = _round_up(N, rt)
    if Np != N:
        x2d = jnp.pad(x2d, ((0, Np - N), (0, 0)))
    out = pl.pallas_call(
        _in_proj_kernel,
        out_shape=jax.ShapeDtypeStruct((Np, G), jnp.float32),
        grid_spec=pltpu.PrefetchScalarGridSpec(
            num_scalar_prefetch=0,
            grid=(Np // rt,),
            in_specs=[
                pl.BlockSpec((rt, I), lambda i: (i, 0)),   # x rows (streamed)
                pl.BlockSpec((I, G), lambda i: (0, 0)),    # W_ih0 (resident)
                pl.BlockSpec((1, G), lambda i: (0, 0)),    # b0    (resident)
            ],
            out_specs=pl.BlockSpec((rt, G), lambda i: (i, 0)),
        ),
        compiler_params=pltpu.CompilerParams(
            dimension_semantics=("parallel",)),
    )(x2d, w, b)
    return out[:N]


# ---------------------------------------------------------------------------
# Kernel 2: fused multi-layer LSTM recurrence (time-blocked grid).
# Gate order matches PyTorch: (i, f, g, o) packed along the 4H lane dim.
# ---------------------------------------------------------------------------
def _lstm_cell(gates, c_prev):
    H = gates.shape[-1] // 4
    i_g = jax.nn.sigmoid(gates[:, 0 * H:1 * H])
    f_g = jax.nn.sigmoid(gates[:, 1 * H:2 * H])
    g_g = jnp.tanh(gates[:, 2 * H:3 * H])
    o_g = jax.nn.sigmoid(gates[:, 3 * H:4 * H])
    c_new = f_g * c_prev + i_g * g_g
    h_new = o_g * jnp.tanh(c_new)
    return h_new, c_new


def _fused_lstm_kernel(xw_ref, whh_ref, wih_ref, b_ref, h_out_ref, h_scr, c_scr):
    @pl.when(pl.program_id(0) == 0)
    def _():
        h_scr[...] = jnp.zeros_like(h_scr)
        c_scr[...] = jnp.zeros_like(c_scr)

    num_layers = whh_ref.shape[0]
    tc = xw_ref.shape[0]

    def step(i, carry):
        # ---- layer 0: input gates precomputed (xw = x @ W_ih0 + b0) ----
        gates = xw_ref[i] + jnp.dot(h_scr[0].astype(jnp.bfloat16), whh_ref[0],
                                    preferred_element_type=jnp.float32)
        h_new, c_new = _lstm_cell(gates, c_scr[0])
        h_scr[0] = h_new
        c_scr[0] = c_new
        x_l = h_new
        # ---- layers 1..L-1: fused in the same step (no HBM round trip) ----
        for l in range(1, num_layers):
            gates = (jnp.dot(x_l.astype(jnp.bfloat16), wih_ref[l - 1],
                             preferred_element_type=jnp.float32)
                     + jnp.dot(h_scr[l].astype(jnp.bfloat16), whh_ref[l],
                               preferred_element_type=jnp.float32)
                     + b_ref[l - 1])
            h_new, c_new = _lstm_cell(gates, c_scr[l])
            h_scr[l] = h_new
            c_scr[l] = c_new
            x_l = h_new
        h_out_ref[i] = x_l.astype(h_out_ref.dtype)
        return carry

    lax.fori_loop(0, tc, step, 0, unroll=True)


def lstm_stack(xw, w_hh, w_ih_rest, b_rest, time_block=16):
    """xw: (T, B, 4H) f32 precomputed layer-0 gates; returns h of last layer (T, B, H) bf16."""
    T, B, G = xw.shape
    L, H, _ = w_hh.shape
    tc = min(time_block, T)
    Tp = _round_up(T, tc)
    if Tp != T:
        xw = jnp.pad(xw, ((0, Tp - T), (0, 0), (0, 0)))
    h_seq = pl.pallas_call(
        _fused_lstm_kernel,
        out_shape=jax.ShapeDtypeStruct((Tp, B, H), jnp.bfloat16),
        grid_spec=pltpu.PrefetchScalarGridSpec(
            num_scalar_prefetch=0,
            grid=(Tp // tc,),
            in_specs=[
                pl.BlockSpec((tc, B, G), lambda t: (t, 0, 0)),          # xw slab (streamed)
                pl.BlockSpec((L, H, G), lambda t: (0, 0, 0)),           # W_hh (resident)
                pl.BlockSpec(w_ih_rest.shape, lambda t: (0, 0, 0)),     # W_ih layers>=1 (resident)
                pl.BlockSpec(b_rest.shape, lambda t: (0, 0, 0)),        # b    layers>=1 (resident)
            ],
            out_specs=pl.BlockSpec((tc, B, H), lambda t: (t, 0, 0)),
            scratch_shapes=[
                pltpu.VMEM((L, B, H), jnp.float32),   # h carry (f32)
                pltpu.VMEM((L, B, H), jnp.float32),   # c carry (f32)
            ],
        ),
        compiler_params=pltpu.CompilerParams(
            dimension_semantics=("arbitrary",)),      # sequential recurrence
    )(xw, w_hh, w_ih_rest, b_rest)
    return h_seq[:T]


# ---------------------------------------------------------------------------
# Kernel 3: output projection + log_softmax (row-tiled, lane-padded classes).
# ---------------------------------------------------------------------------
def _out_proj_kernel(h_ref, w_ref, b_ref, o_ref):
    logits = (jnp.dot(h_ref[...], w_ref[...],
                      preferred_element_type=jnp.float32)
              + b_ref[...])
    m = jnp.max(logits, axis=-1, keepdims=True)
    shifted = logits - m
    lse = jnp.log(jnp.sum(jnp.exp(shifted), axis=-1, keepdims=True))
    o_ref[...] = (shifted - lse).astype(o_ref.dtype)


def output_logsoftmax(h2d, w_out, b_out):
    """h2d: (N, H) bf16; w_out: (H, Opad) bf16; b_out: (1, Opad) f32 -> (N, Opad) f32."""
    N, H = h2d.shape
    Opad = w_out.shape[-1]
    rt = min(256, _round_up(N, 8))
    Np = _round_up(N, rt)
    if Np != N:
        h2d = jnp.pad(h2d, ((0, Np - N), (0, 0)))
    out = pl.pallas_call(
        _out_proj_kernel,
        out_shape=jax.ShapeDtypeStruct((Np, Opad), jnp.float32),
        grid_spec=pltpu.PrefetchScalarGridSpec(
            num_scalar_prefetch=0,
            grid=(Np // rt,),
            in_specs=[
                pl.BlockSpec((rt, H), lambda i: (i, 0)),
                pl.BlockSpec((H, Opad), lambda i: (0, 0)),
                pl.BlockSpec((1, Opad), lambda i: (0, 0)),
            ],
            out_specs=pl.BlockSpec((rt, Opad), lambda i: (i, 0)),
        ),
        compiler_params=pltpu.CompilerParams(
            dimension_semantics=("parallel",)),
    )(h2d, w_out, b_out)
    return out[:N]


# ---------------------------------------------------------------------------
# Parameter init (deterministic, synthetic) and full forward.
# ---------------------------------------------------------------------------
def init_params(key, input_size=64, hidden_size=32, num_layers=2, output_size=28):
    I, H, L, O = input_size, hidden_size, num_layers, output_size
    G = 4 * H
    Opad = _round_up(O, 128)
    scale = 0.1
    keys = jax.random.split(key, 3 * L + 4)
    kit = iter(keys)

    def rnd(shape):
        return scale * jax.random.normal(next(kit), shape, jnp.float32)

    w_ih0 = rnd((I, G))
    b0 = rnd((1, G))
    w_hh = jnp.stack([rnd((H, G)) for _ in range(L)])
    wr, br = [], []
    for _ in range(1, L):
        wr.append(rnd((H, G)))
        br.append(rnd((1, G)))
    if not wr:   # num_layers == 1: dummy block, never read by the kernel's layer loop
        wr.append(jnp.zeros((H, G), jnp.float32))
        br.append(jnp.zeros((1, G), jnp.float32))
    w_ih_rest = jnp.stack(wr)
    b_rest = jnp.stack(br)

    w_out = rnd((H, O))
    b_out = rnd((O,))
    w_out_p = jnp.zeros((H, Opad), jnp.float32).at[:, :O].set(w_out)
    b_out_p = jnp.full((1, Opad), _NEG_BIG, jnp.float32).at[0, :O].set(b_out)

    return {
        "w_ih0": w_ih0.astype(jnp.bfloat16),
        "b0": b0,
        "w_hh": w_hh.astype(jnp.bfloat16),
        "w_ih_rest": w_ih_rest.astype(jnp.bfloat16),
        "b_rest": b_rest,
        "w_out": w_out_p.astype(jnp.bfloat16),
        "b_out": b_out_p,
        "output_size": O,
    }


def lstm_asr_forward(params, batch_features, time_block=16):
    """batch_features: (B, T, input_size) -> (B, T, output_size) log-probs."""
    x = jnp.transpose(batch_features, (1, 0, 2))             # (T, B, I) time-major
    T, B, I = x.shape
    G = params["w_hh"].shape[-1]
    H = G // 4
    O = params["output_size"]

    # Hoisted layer-0 input projection: one big MXU-friendly matmul.
    xw = input_gate_proj(x.reshape(T * B, I).astype(jnp.bfloat16),
                         params["w_ih0"], params["b0"])      # (T*B, 4H) f32
    xw = xw.reshape(T, B, G)

    # Fused multi-layer recurrence (only h @ W_hh + cross-layer work per step).
    h_seq = lstm_stack(xw, params["w_hh"], params["w_ih_rest"], params["b_rest"],
                       time_block=time_block)                # (T, B, H) bf16

    # Output projection + log_softmax (classes padded to 128 lanes inside the kernel).
    logp = output_logsoftmax(h_seq.reshape(T * B, H), params["w_out"], params["b_out"])
    logp = logp[:, :O].reshape(T, B, O)
    return jnp.transpose(logp, (1, 0, 2))                    # (B, T, O)


# ---------------------------------------------------------------------------
# Pure-JAX reference (same bf16 rounding points) for a sanity check.
# ---------------------------------------------------------------------------
def _reference_forward(params, batch_features):
    def bf(v):
        return v.astype(jnp.bfloat16).astype(jnp.float32)

    x = jnp.transpose(batch_features, (1, 0, 2)).astype(jnp.float32)
    T, B, I = x.shape
    G = params["w_hh"].shape[-1]
    H = G // 4
    L = params["w_hh"].shape[0]
    O = params["output_size"]
    w_ih0 = params["w_ih0"].astype(jnp.float32)
    w_hh = params["w_hh"].astype(jnp.float32)
    w_ih_rest = params["w_ih_rest"].astype(jnp.float32)

    def cell(g, c):
        i = jax.nn.sigmoid(g[:, :H])
        f = jax.nn.sigmoid(g[:, H:2 * H])
        gg = jnp.tanh(g[:, 2 * H:3 * H])
        o = jax.nn.sigmoid(g[:, 3 * H:])
        c = f * c + i * gg
        return o * jnp.tanh(c), c

    h = jnp.zeros((L, B, H), jnp.float32)
    c = jnp.zeros((L, B, H), jnp.float32)
    outs = []
    for t in range(T):
        g = bf(x[t]) @ w_ih0 + params["b0"] + bf(h[0]) @ w_hh[0]
        h0, c0 = cell(g, c[0])
        h, c = h.at[0].set(h0), c.at[0].set(c0)
        xl = h0
        for l in range(1, L):
            g = bf(xl) @ w_ih_rest[l - 1] + params["b_rest"][l - 1] + bf(h[l]) @ w_hh[l]
            hl, cl = cell(g, c[l])
            h, c = h.at[l].set(hl), c.at[l].set(cl)
            xl = hl
        outs.append(xl)
    hseq = jnp.stack(outs)                                   # (T, B, H)
    logits = bf(hseq).reshape(T * B, H) @ params["w_out"].astype(jnp.float32) + params["b_out"]
    logp = jax.nn.log_softmax(logits, axis=-1)[:, :O].reshape(T, B, O)
    return jnp.transpose(logp, (1, 0, 2))


if __name__ == "__main__":
    # Small shapes consistent with the module's interface.
    B, T = 2, 8
    input_size, hidden_size, num_layers, output_size = 64, 32, 2, 28

    key = jax.random.PRNGKey(0)
    key, pkey, xkey = jax.random.split(key, 3)
    params = init_params(pkey, input_size, hidden_size, num_layers, output_size)
    batch_features = jax.random.normal(xkey, (B, T, input_size), jnp.float32)

    out = lstm_asr_forward(params, batch_features)
    out = jax.block_until_ready(out)

    assert out.shape == (B, T, output_size)
    # log-probabilities should (approximately) sum to 1 after exp.
    sums = jnp.exp(out).sum(axis=-1)
    assert bool(jnp.allclose(sums, 1.0, atol=1e-4))
    # Sanity check against a pure-JAX reference with matching bf16 rounding points.
    ref = _reference_forward(params, batch_features)
    assert bool(jnp.allclose(out, ref, atol=2e-2)), "mismatch vs JAX reference"

    print("KERNEL_OK")
</pallas_src>

<mosaic_0001>
module attributes {stable_mosaic.version = 11 : i64} {
  func.func @_in_proj_kernel(%arg0: i32, %arg1: memref<16x64xbf16, #tpu.memory_space<vmem>>, %arg2: memref<64x128xbf16, #tpu.memory_space<vmem>>, %arg3: memref<1x128xf32, #tpu.memory_space<vmem>>, %arg4: memref<16x128xf32, #tpu.memory_space<vmem>>) attributes {dimension_semantics = [#tpu.dimension_semantics<parallel>], iteration_bounds = array<i64: 1>, scalar_prefetch = 0 : i64, scratch_operands = 0 : i64, tpu.core_type = #tpu.core_type<tc>, window_params = [{transform_indices = @transform_0, window_bounds = array<i64: 16, 64>}, {pipeline_mode = #tpu.pipeline_mode<synchronous>, transform_indices = @transform_1, window_bounds = array<i64: 64, 128>}, {pipeline_mode = #tpu.pipeline_mode<synchronous>, transform_indices = @transform_2, window_bounds = array<i64: 1, 128>}, {transform_indices = @transform_3, window_bounds = array<i64: 16, 128>}]} {
    %c0 = arith.constant 0 : index
    %c0_0 = arith.constant 0 : index
    %0 = vector.load %arg1[%c0, %c0_0] : memref<16x64xbf16, #tpu.memory_space<vmem>>, vector<16x64xbf16>
    %c0_1 = arith.constant 0 : index
    %c0_2 = arith.constant 0 : index
    %1 = vector.load %arg2[%c0_1, %c0_2] : memref<64x128xbf16, #tpu.memory_space<vmem>>, vector<64x128xbf16>
    %cst = arith.constant dense<0.000000e+00> : vector<16x128xf32>
    %2 = tpu.matmul %0, %1, %cst {dimension_numbers = #tpu.dot_dimension_numbers<[1], [0], [0], [1], [0, 0, 1, 1], [], []>} : vector<16x64xbf16>, vector<64x128xbf16>, vector<16x128xf32> -> vector<16x128xf32>
    %c0_3 = arith.constant 0 : index
    %c0_4 = arith.constant 0 : index
    %3 = vector.load %arg3[%c0_3, %c0_4] : memref<1x128xf32, #tpu.memory_space<vmem>>, vector<1x128xf32>
    %4 = vector.broadcast %3 : vector<1x128xf32> to vector<16x128xf32>
    %5 = arith.addf %2, %4 : vector<16x128xf32>
    %c0_5 = arith.constant 0 : index
    %c0_6 = arith.constant 0 : index
    %6 = vector.load %arg4[%c0_5, %c0_6] : memref<16x128xf32, #tpu.memory_space<vmem>>, vector<16x128xf32>
    tpu.vector_store %arg4[%c0_5, %c0_6], %5 {strides = array<i32>} : memref<16x128xf32, #tpu.memory_space<vmem>>, vector<16x128xf32>,
    return
  }
  func.func @transform_0(%arg0: i32) -> (i32, i32) {
    %c0_i32 = arith.constant 0 : i32
    %c0_i32_0 = arith.constant 0 : i32
    return %arg0, %c0_i32 : i32, i32
  }
  func.func @transform_1(%arg0: i32) -> (i32, i32) {
    %c0_i32 = arith.constant 0 : i32
    %c0_i32_0 = arith.constant 0 : i32
    %c0_i32_1 = arith.constant 0 : i32
    return %c0_i32, %c0_i32_0 : i32, i32
  }
  func.func @transform_2(%arg0: i32) -> (i32, i32) {
    %c0_i32 = arith.constant 0 : i32
    %c0_i32_0 = arith.constant 0 : i32
    %c0_i32_1 = arith.constant 0 : i32
    return %c0_i32, %c0_i32_0 : i32, i32
  }
  func.func @transform_3(%arg0: i32) -> (i32, i32) {
    %c0_i32 = arith.constant 0 : i32
    %c0_i32_0 = arith.constant 0 : i32
    return %arg0, %c0_i32 : i32, i32
  }
}

</mosaic_0001>

<llo_original>
// kernel: tpu_custom_call.1
$region0: #{tpu_custom_call.1}
  #allocation0 [shape = 'u32[]', space=smem, size = 0x4, offset = 0x4, fixed_abs, tag = 'smem constant byte address 0x4 - core index']
  #allocation1 [shape = 'u32[144,128]{1,0:T(1,128)}', space=vmem, size = 0x12000, scoped, tag = 'internal scratch']
  %s0 = inlined_call_operand.hbm [shape: bf16[16,64], index: 0, kind: input, shape index: {}]
  %s1 = inlined_call_operand.hbm [shape: bf16[64,128], index: 1, kind: input, shape index: {}]
  %s2 = inlined_call_operand.vmem [shape: f32[1,128], index: 2, kind: input, shape index: {}]
  %s3 = inlined_call_operand.hbm [shape: f32[16,128], index: 3, kind: output, shape index: {}]
  %s4 = sld [smem:[#allocation0]]
  $region30: #{tpu_custom_call.1} parent=0
    _
  %s6 = ssub.s32 1, %s4
  %s7 = scalar_select 0, %s6, %s4
  $region1: #{tpu_custom_call.1} parent=0
    #allocation2 [shape = 'u8[4096]{0}', space=vmem, size = 0x1000, scoped, tag = 'input window, operand 0, single buffered']
    #allocation3 [shape = 's32[1]{0}', space=sflag, size = 0x4, scoped, tag = 'scoped memory for tpu_custom_call.1']
    #allocation4 [shape = 's32[1]{0}', space=sflag, size = 0x4, scoped, tag = 'scoped memory for tpu_custom_call.1']
    #allocation5 [shape = 'u8[16384]{0}', space=vmem, size = 0x4000, scoped, tag = 'input window, operand 1, single buffered']
    #allocation6 [shape = 's32[1]{0}', space=sflag, size = 0x4, scoped, tag = 'scoped memory for tpu_custom_call.1']
    #allocation7 [shape = 'u8[8192]{0}', space=vmem, size = 0x2000, scoped, tag = 'output window, operand 0, single buffered']
    %8 = vsyncpa [#allocation3], 0
    %9 = vsyncpa [#allocation6], 0
    %10 = vsyncpa [#allocation4], 0
    // Predicated region
    $region2: #{tpu_custom_call.1} parent=1 // pred_check
      _
    $region3: #{tpu_custom_call.1} parent=1 // pred_check_branch
      %12 = sbr.rel (0) target = $region5
    $region4: #{tpu_custom_call.1} parent=1 // pred_region
      %s14 = ssub.s32 128, 128
      %15 = vsyncadd [#allocation3], %s14
      %s16 = sshll.u32 [#allocation2], 4
      %s17 = int_to_ptr.vmem [resolvable:$true] %s16
      %22 = dma.hbm_to_vmem [thread:$0]  %s0, 128, %s17, [#allocation3], 64, 64, 4
    $region5: #{tpu_custom_call.1} parent=1 // pred_fallthru
      _
    // Predicated region
    $region6: #{tpu_custom_call.1} parent=1 // pred_check
      _
    $region7: #{tpu_custom_call.1} parent=1 // pred_check_branch
      %24 = sbr.rel (0) target = $region9
    $region8: #{tpu_custom_call.1} parent=1 // pred_region
      %s26 = ssub.s32 512, 512
      %27 = vsyncadd [#allocation6], %s26
      %s28 = sshll.u32 [#allocation5], 4
      %s29 = int_to_ptr.vmem [resolvable:$true] %s28
      %34 = dma.hbm_to_vmem [thread:$0]  %s1, 512, %s29, [#allocation6], 64, 64, 4
    $region9: #{tpu_custom_call.1} parent=1 // pred_fallthru
      _
    // Predicated region
    $region10: #{tpu_custom_call.1} parent=1 // pred_check
      _
    $region11: #{tpu_custom_call.1} parent=1 // pred_check_branch
      %36 = sbr.rel (0) target = $region13
    $region12: #{tpu_custom_call.1} parent=1 // pred_region
      _
    $region13: #{tpu_custom_call.1} parent=1 // pred_fallthru
      _
    // Predicated region
    $region14: #{tpu_custom_call.1} parent=1 // pred_check
      _
    $region15: #{tpu_custom_call.1} parent=1 // pred_check_branch
      %38 = sbr.rel (0) target = $region17
    $region16: #{tpu_custom_call.1} parent=1 // pred_region
      %39 = dma.done [#allocation3], 128
    $region17: #{tpu_custom_call.1} parent=1 // pred_fallthru
      _
    // Predicated region
    $region18: #{tpu_custom_call.1} parent=1 // pred_check
      _
    $region19: #{tpu_custom_call.1} parent=1 // pred_check_branch
      %41 = sbr.rel (0) target = $region21
    $region20: #{tpu_custom_call.1} parent=1 // pred_region
      %42 = dma.done [#allocation6], 512
    $region21: #{tpu_custom_call.1} parent=1 // pred_fallthru
      _
    %v44 = vld [vmem:[#allocation2] sm:$0xf]
    %v45 = vld [vmem:[#allocation2 + $0x4] sm:$0xf]
    %v46 = vld [vmem:[#allocation5] sm:$0xf]
    %v47 = vld [vmem:[#allocation5 + $0x4] sm:$0xf]
    %v48 = vld [vmem:[#allocation5 + $0x8] sm:$0xf]
    %v49 = vld [vmem:[#allocation5 + $0xc] sm:$0xf]
    %v50 = vld [vmem:[#allocation5 + $0x10] sm:$0xf]
    %v51 = vld [vmem:[#allocation5 + $0x14] sm:$0xf]
    %v52 = vld [vmem:[#allocation5 + $0x18] sm:$0xf]
    %v53 = vld [vmem:[#allocation5 + $0x1c] sm:$0xf]
    %v54 = vld [vmem:[%s2] sm:$0x1]
    %v56 = vlaneseq
    %v57 = vshrl.u32 %v56, 7
    %v58 = vsub.s32 0, %v57
    %v59 = vrot.slane %v54, %v58
    %v63 = vunpack.c.l.b16 %v44
    %v64 = vunpack.c.l.b16 %v45
    %v65 = vpack.c.b16 %v64, %v63
    %v74 = vunpack.c.l.b16 %v46
    %v75 = vunpack.c.l.b16 %v47
    %v76 = vunpack.c.l.b16 %v48
    %v77 = vunpack.c.l.b16 %v49
    %v78 = vunpack.c.l.b16 %v50
    %v79 = vunpack.c.l.b16 %v51
    %v80 = vunpack.c.l.b16 %v52
    %v81 = vunpack.c.l.b16 %v53
    %v82 = vpack.c.b16 %v75, %v74
    %v83 = vpack.c.b16 %v77, %v76
    %v84 = vpack.c.b16 %v79, %v78
    %v85 = vpack.c.b16 %v81, %v80
    %vm90 = vcmask 523264
    %v92 = vsel %vm90, %v65, 0
    %94 = vmatprep.subr.bf16.mxu0 0
    %95 = vmatpush1.bf16.msra.mxu0 %v82
    %96 = vmatprep.subr.bf16.mxu0 0
    %97 = vmatpush1.bf16.msra.mxu0 %v83
    %98 = vmatprep.subr.bf16.mxu0 0
    %99 = vmatpush1.bf16.msra.mxu0 %v84
    %100 = vmatprep.subr.bf16.mxu0 0
    %101 = vmatpush1.bf16.msra.mxu0 %v85
    %102 = vmatprep.subr.bf16.mxu0 0
    %103 = vmatpush1.bf16.msra.mxu0 0
    %104 = vmatprep.subr.bf16.mxu0 0
    %105 = vmatpush1.bf16.msra.mxu0 0
    %106 = vmatprep.subr.bf16.mxu0 0
    %107 = vmatpush1.bf16.msra.mxu0 0
    %108 = vmatprep.subr.bf16.mxu0 0
    %109 = vmatpush1.bf16.msra.mxu0 0
    %110 = vmatprep.subr.bf16.mxu0 0
    %111 = vmatpush1.bf16.msra.mxu0 0
    %112 = vmatprep.subr.bf16.mxu0 0
    %113 = vmatpush1.bf16.msra.mxu0 0
    %114 = vmatprep.subr.bf16.mxu0 0
    %115 = vmatpush1.bf16.msra.mxu0 0
    %116 = vmatprep.subr.bf16.mxu0 0
    %117 = vmatpush1.bf16.msra.mxu0 0
    %118 = vmatprep.subr.bf16.mxu0 0
    %119 = vmatpush1.bf16.msra.mxu0 0
    %120 = vmatprep.subr.bf16.mxu0 0
    %121 = vmatpush1.bf16.msra.mxu0 0
    %122 = vmatprep.subr.bf16.mxu0 0
    %123 = vmatpush1.bf16.msra.mxu0 0
    %124 = vmatprep.subr.bf16.mxu0 0
    %125 = vmatpush1.bf16.msra.mxu0 0
    %126 = vmatprep.mubr.bf16.mxu0 0
    %127 = vmatmul.mubr.bf16.gmra.mrb[0].mxu0 %v92
    %v128 = vpop.f32.mrb[0].mxu0
    %v129 = vadd.f32 %v59, %v128
    %v130 = vpop.f32.mrb[0].mxu0
    %v131 = vpop.f32.mrb[0].mxu0
    %v132 = vadd.f32 %v59, %v131
    %v133 = vpop.f32.mrb[0].mxu0
    %134 = vdwg.mxu0
    %135 = vst [vmem:[#allocation7] sm:$0xff] %v129
    %136 = vst [vmem:[#allocation7 + $0x8] sm:$0xff] %v132
    // Predicated region
    $region22: #{tpu_custom_call.1} parent=1 // pred_check
      _
    $region23: #{tpu_custom_call.1} parent=1 // pred_check_branch
      %138 = sbr.rel (0) target = $region25
    $region24: #{tpu_custom_call.1} parent=1 // pred_region
      %s140 = ssub.s32 256, 256
      %141 = vsyncadd [#allocation4], %s140
      %s142 = sshll.u32 [#allocation7], 4
      %s143 = int_to_ptr.vmem [resolvable:$true] %s142
      %148 = dma.vmem_to_hbm [thread:$0]  %s143, 256, %s3, [#allocation4], 128, 128, 8
    $region25: #{tpu_custom_call.1} parent=1 // pred_fallthru
      _
    // Predicated region
    $region26: #{tpu_custom_call.1} parent=1 // pred_check
      _
    $region27: #{tpu_custom_call.1} parent=1 // pred_check_branch
      %150 = sbr.rel (0) target = $region29
    $region28: #{tpu_custom_call.1} parent=1 // pred_region
      %151 = dma.done [#allocation4], 256
    $region29: #{tpu_custom_call.1} parent=1 // pred_fallthru
      _
    %152 = vsyncpa [#allocation3], 1
    %153 = vsyncpa [#allocation6], 1
    %154 = vsyncpa [#allocation4], 1

</llo_original>
